<compile_context>
chip_gen: v5e
topology: v5e:2x2
jax: 0.10.0
libtpu: 0.0.40
codegen_flags: <defaults>
</compile_context>

<pallas_src>
import functools

import jax
import jax.numpy as jnp
from jax import lax
from jax.experimental import pallas as pl
from jax.experimental.pallas import tpu as pltpu

NEG_FILL = -10000.0   # matches .fill_(-10000) in the PyTorch module
PAD_TRANS = -1e9      # transition score used for padded (non-existent) labels


def _round_up(x, m):
    return ((x + m - 1) // m) * m


def _crf_fwd_kernel(lens_ref, logits_ref, e_ref, rowmax_ref, es_ref,
                    out_ref, q_ref, m_ref, lmx_ref, *, start_idx):
    # lens_ref:   [1, TB]      int32  sequence lengths (batch tile, on lanes)
    # logits_ref: [TT, L, TB]  f32    time-major, lane-dense-batch logits tile
    # e_ref:      [L, L]       f32    E[i, j] = exp(trans[i, j] - rowmax[i])
    # rowmax_ref: [L, 1]       f32    rowmax[i] = max_j trans[i, j]
    # es_ref:     [L, 1]       f32    exp(trans[stop_idx, :] - max(trans[stop_idx, :]))
    # out_ref:    [1, TB]      f32    log-partition (minus max_stop) per batch lane
    # q_ref:      [L, TB]      f32    carried exp(alpha - m)
    # m_ref:      [1, TB]      f32    carried offset m
    # lmx_ref:    [1, TB]      f32    carried log(max_j q_j)
    TT, L, TB = logits_ref.shape
    t_idx = pl.program_id(1)
    n_t = pl.num_programs(1)

    # Init carried state at the first time tile of each batch tile:
    # alpha = -10000 everywhere, 0 at start  ->  m = 0, q = onehot(start), lmx = 0
    # (exp(-10000) underflows to 0 in f32, exactly as it does inside the
    #  reference's log-sum-exp).
    @pl.when(t_idx == 0)
    def _():
        lbl = lax.broadcasted_iota(jnp.int32, (L, TB), 0)
        q_ref[...] = jnp.where(lbl == start_idx, 1.0, 0.0).astype(jnp.float32)
        m_ref[...] = jnp.zeros((1, TB), jnp.float32)
        lmx_ref[...] = jnp.zeros((1, TB), jnp.float32)

    e_mat = e_ref[...]                      # [L, L]
    rowmax = rowmax_ref[...]                # [L, 1]  broadcasts over lanes
    rel = lens_ref[...] - t_idx * TT        # [1, TB] hoisted out of the loop

    def body(i, carry):
        m, q, lmx = carry
        logit = logits_ref[i]                                       # [L, TB]
        g = logit + rowmax                                          # [L, TB] (VPU)
        c = jnp.max(g, axis=0, keepdims=True)                       # [1, TB] (XLU)
        s = jnp.dot(e_mat, q, preferred_element_type=jnp.float32)   # [L, TB] (MXU)
        w = jnp.exp(g - (c + lmx))                                  # [L, TB] (EUP)
        q_new = w * s                                               # [L, TB] (VPU)
        mx = jnp.max(q_new, axis=0, keepdims=True)                  # [1, TB] (XLU)
        # mx >= exp(-(transition row spread)); the guard only fires for
        # impossible-state setups (e.g. -inf transitions).
        lmx_new = jnp.log(jnp.maximum(mx, 1e-37))                   # [1, TB] (EUP)
        m_new = m + c + lmx                                         # [1, TB]
        upd = rel > i                                               # length mask
        return (jnp.where(upd, m_new, m),
                jnp.where(upd, q_new, q),
                jnp.where(upd, lmx_new, lmx))

    m, q, lmx = lax.fori_loop(
        0, TT, body, (m_ref[...], q_ref[...], lmx_ref[...]),
        unroll=min(8, TT))
    m_ref[...] = m
    q_ref[...] = q
    lmx_ref[...] = lmx

    # Stop transition + final log-sum-exp over labels at the last time tile.
    @pl.when(t_idx == n_t - 1)
    def _():
        tot = jnp.sum(q * es_ref[...], axis=0, keepdims=True)       # [1, TB]
        out_ref[...] = m + jnp.log(jnp.maximum(tot, 1e-37))


def crf_forward(logits, lens, transitions, *, batch_tile=128, time_tile=256,
                logits_vmem_budget=8 * 1024 * 1024):
    """logits: [B, T, L], lens: [B] int, transitions: [L, L] -> [B] f32."""
    B, T, L = logits.shape
    assert transitions.shape == (L, L)
    start_idx, stop_idx = L - 2, L - 1

    logits = logits.astype(jnp.float32)
    transitions = transitions.astype(jnp.float32)

    # Pad the label axis up to a sublane multiple; padded labels get PAD_TRANS
    # transitions and zero logits, so their q stays exactly 0 and they never
    # contribute to any sum.
    Lp = max(8, _round_up(L, 8))
    if Lp != L:
        transitions = jnp.pad(transitions, ((0, Lp - L), (0, Lp - L)),
                              constant_values=PAD_TRANS)
        logits = jnp.pad(logits, ((0, 0), (0, 0), (0, Lp - L)))

    # Loop-invariant transition preprocessing (one-time, O(L^2)).
    rowmax = jnp.max(transitions, axis=1)                    # [Lp]
    e_mat = jnp.exp(transitions - rowmax[:, None])           # [Lp, Lp]
    stop_row = transitions[stop_idx]                         # [Lp]
    max_stop = jnp.max(stop_row)
    es = jnp.exp(stop_row - max_stop)                        # [Lp]

    # Batch tiling: batch lives on the 128-lane axis. One full-extent tile for
    # small batches; otherwise lane-aligned (x128) tiles.
    if B <= batch_tile:
        TB = _round_up(B, 8)
        B_pad = TB
    else:
        assert batch_tile % 128 == 0, "batch_tile must be a multiple of 128"
        TB = batch_tile
        B_pad = _round_up(B, TB)
    # TODO(synk): on v7x (2 TensorCores) it pays to force >=2 batch tiles even
    # when B <= 2*128 so the "parallel" axis actually shards across cores.

    # Time tiling: as large as the double-buffered logits tile budget allows,
    # balanced so the padded tail is minimal.
    bytes_per_step = 2 * Lp * TB * 4
    tt_cap = max(1, logits_vmem_budget // bytes_per_step)
    tt_max = max(1, min(time_tile, tt_cap, T))
    n_tt = -(-T // tt_max)
    TT = -(-T // n_tt)
    T_pad = n_tt * TT

    logits_p = jnp.pad(logits, ((0, B_pad - B), (0, T_pad - T), (0, 0)))
    # Single XLA rearrangement to the time-major, lane-dense-batch layout.
    logits_tlb = jnp.transpose(logits_p, (1, 2, 0))          # [T_pad, Lp, B_pad]
    lens_p = jnp.pad(lens.astype(jnp.int32), (0, B_pad - B)).reshape(1, B_pad)
    rowmax_col = rowmax.reshape(Lp, 1)
    es_col = es.reshape(Lp, 1)

    # Grid order matters: the carried (m, q, lmx) VMEM scratch requires the
    # time axis to be the minor, "arbitrary" grid axis.
    grid = (B_pad // TB, n_tt)

    out = pl.pallas_call(
        functools.partial(_crf_fwd_kernel, start_idx=start_idx),
        out_shape=jax.ShapeDtypeStruct((1, B_pad), jnp.float32),
        grid=grid,
        in_specs=[
            pl.BlockSpec((1, TB), lambda b, t: (0, b)),           # lens
            pl.BlockSpec((TT, Lp, TB), lambda b, t: (t, 0, b)),   # logits [T,L,B]
            pl.BlockSpec((Lp, Lp), lambda b, t: (0, 0)),          # exp(trans - rowmax)
            pl.BlockSpec((Lp, 1), lambda b, t: (0, 0)),           # rowmax
            pl.BlockSpec((Lp, 1), lambda b, t: (0, 0)),           # exp(stop - max_stop)
        ],
        out_specs=pl.BlockSpec((1, TB), lambda b, t: (0, b)),
        scratch_shapes=[
            pltpu.VMEM((Lp, TB), jnp.float32),    # q = exp(alpha - m)
            pltpu.VMEM((1, TB), jnp.float32),     # m
            pltpu.VMEM((1, TB), jnp.float32),     # lmx = log(max_j q_j)
        ],
        compiler_params=pltpu.CompilerParams(
            dimension_semantics=("parallel", "arbitrary"),
            vmem_limit_bytes=32 * 1024 * 1024),
    )(lens_p, logits_tlb, e_mat, rowmax_col, es_col)
    return out[0, :B] + max_stop


def crf_forward_ref(logits, lens, transitions):
    """Pure-JAX reference mirroring the PyTorch forward exactly."""
    B, T, L = logits.shape
    start_idx, stop_idx = L - 2, L - 1
    logits = logits.astype(jnp.float32)
    transitions = transitions.astype(jnp.float32)
    alpha = jnp.full((B, L), NEG_FILL, jnp.float32).at[:, start_idx].set(0.0)
    c_lens = lens.astype(jnp.int32)
    for t in range(T):
        logit = logits[:, t, :]
        mat = transitions[None, :, :] + alpha[:, None, :] + logit[:, :, None]
        m = jnp.max(mat, axis=2)
        alpha_nxt = m + jnp.log(jnp.sum(jnp.exp(mat - m[:, :, None]), axis=2))
        mask = (c_lens > 0).astype(jnp.float32)[:, None]
        alpha = mask * alpha_nxt + (1.0 - mask) * alpha
        c_lens = c_lens - 1
    alpha = alpha + transitions[stop_idx][None, :]
    m = jnp.max(alpha, axis=1)
    return m + jnp.log(jnp.sum(jnp.exp(alpha - m[:, None]), axis=1))


if __name__ == "__main__":
    # Config 1: module defaults, tiny shapes (single batch tile, single time tile).
    vocab_size = 14
    n_labels = vocab_size + 2          # 16
    batch, seq_len = 4, 8

    key = jax.random.PRNGKey(0)
    k_trans, k_logits, k_lens, k2a, k2b, k3t, k3l, k3n = jax.random.split(key, 8)

    # nn.Parameter(torch.randn(n_labels, n_labels))
    transitions = jax.random.normal(k_trans, (n_labels, n_labels), jnp.float32)
    logits = jax.random.normal(k_logits, (batch, seq_len, n_labels), jnp.float32)
    lens = jax.random.randint(k_lens, (batch,), 1, seq_len + 1, jnp.int32)

    norm = crf_forward(logits, lens, transitions)
    jax.block_until_ready(norm)
    norm_ref = crf_forward_ref(logits, lens, transitions)
    assert norm.shape == (batch,)
    assert jnp.allclose(norm, norm_ref, rtol=2e-4, atol=2e-4), (norm, norm_ref)

    # Config 2: batch padding + longer sequence (still single tiles).
    batch2, seq2 = 5, 40
    logits2 = jax.random.normal(k2a, (batch2, seq2, n_labels), jnp.float32)
    lens2 = jax.random.randint(k2b, (batch2,), 1, seq2 + 1, jnp.int32)
    norm2 = crf_forward(logits2, lens2, transitions)
    jax.block_until_ready(norm2)
    norm2_ref = crf_forward_ref(logits2, lens2, transitions)
    assert jnp.allclose(norm2, norm2_ref, rtol=2e-4, atol=2e-4), (norm2, norm2_ref)

    # Config 3: non-multiple-of-8 label count, multiple batch tiles (TB=128)
    # and multiple time tiles (forced small time_tile) to exercise the label
    # padding and the carried-state grid paths.
    vocab3 = 11
    n_labels3 = vocab3 + 2             # 13
    batch3, seq3 = 136, 50
    transitions3 = jax.random.normal(k3t, (n_labels3, n_labels3), jnp.float32)
    logits3 = jax.random.normal(k3l, (batch3, seq3, n_labels3), jnp.float32)
    lens3 = jax.random.randint(k3n, (batch3,), 1, seq3 + 1, jnp.int32)
    norm3 = crf_forward(logits3, lens3, transitions3, time_tile=16)
    jax.block_until_ready(norm3)
    norm3_ref = crf_forward_ref(logits3, lens3, transitions3)
    assert jnp.allclose(norm3, norm3_ref, rtol=2e-4, atol=2e-4), (norm3, norm3_ref)

    print("KERNEL_OK")
</pallas_src>

<mosaic_0001>
module attributes {stable_mosaic.version = 11 : i64} {
  func.func @_crf_fwd_kernel(%arg0: i32, %arg1: i32, %arg2: memref<1x8xi32, #tpu.memory_space<vmem>>, %arg3: memref<8x16x8xf32, #tpu.memory_space<vmem>>, %arg4: memref<16x16xf32, #tpu.memory_space<vmem>>, %arg5: memref<16x1xf32, #tpu.memory_space<vmem>>, %arg6: memref<16x1xf32, #tpu.memory_space<vmem>>, %arg7: memref<1x8xf32, #tpu.memory_space<vmem>>, %arg8: memref<16x8xf32, #tpu.memory_space<vmem>>, %arg9: memref<1x8xf32, #tpu.memory_space<vmem>>, %arg10: memref<1x8xf32, #tpu.memory_space<vmem>>) attributes {dimension_semantics = [#tpu.dimension_semantics<parallel>, #tpu.dimension_semantics<arbitrary>], iteration_bounds = array<i64: 1, 1>, scalar_prefetch = 0 : i64, scratch_operands = 3 : i64, tpu.core_type = #tpu.core_type<tc>, window_params = [{transform_indices = @transform_0, window_bounds = array<i64: 1, 8>}, {transform_indices = @transform_1, window_bounds = array<i64: 8, 16, 8>}, {pipeline_mode = #tpu.pipeline_mode<synchronous>, transform_indices = @transform_2, window_bounds = array<i64: 16, 16>}, {pipeline_mode = #tpu.pipeline_mode<synchronous>, transform_indices = @transform_3, window_bounds = array<i64: 16, 1>}, {pipeline_mode = #tpu.pipeline_mode<synchronous>, transform_indices = @transform_4, window_bounds = array<i64: 16, 1>}, {transform_indices = @transform_5, window_bounds = array<i64: 1, 8>}]} {
    %c0_i32 = arith.constant 0 : i32
    %0 = arith.cmpi eq, %arg1, %c0_i32 : i32
    %1 = arith.extui %0 : i1 to i32
    %c0_i32_0 = arith.constant 0 : i32
    %2 = arith.cmpi ne, %1, %c0_i32_0 : i32
    scf.if %2 {
      %234 = tpu.iota {dimensions = array<i32: 0>} : vector<16x8xi32>
      %c14_i32 = arith.constant 14 : i32
      %235 = vector.broadcast %c14_i32 : i32 to vector<16x8xi32>
      %236 = arith.cmpi eq, %234, %235 : vector<16x8xi32>
      %cst_69 = arith.constant 1.000000e+00 : f32
      %cst_70 = arith.constant 0.000000e+00 : f32
      %237 = vector.broadcast %cst_69 : f32 to vector<16x8xf32>
      %238 = vector.broadcast %cst_70 : f32 to vector<16x8xf32>
      %239 = arith.select %236, %237, %238 : vector<16x8xi1>, vector<16x8xf32>
      %c0_71 = arith.constant 0 : index
      %c0_72 = arith.constant 0 : index
      %240 = vector.load %arg8[%c0_71, %c0_72] : memref<16x8xf32, #tpu.memory_space<vmem>>, vector<16x8xf32>
      tpu.vector_store %arg8[%c0_71, %c0_72], %239 {strides = array<i32>} : memref<16x8xf32, #tpu.memory_space<vmem>>, vector<16x8xf32>,
      %cst_73 = arith.constant 0.000000e+00 : f32
      %241 = vector.broadcast %cst_73 : f32 to vector<1x8xf32>
      %c0_74 = arith.constant 0 : index
      %c0_75 = arith.constant 0 : index
      %242 = vector.load %arg9[%c0_74, %c0_75] : memref<1x8xf32, #tpu.memory_space<vmem>>, vector<1x8xf32>
      tpu.vector_store %arg9[%c0_74, %c0_75], %241 {strides = array<i32>} : memref<1x8xf32, #tpu.memory_space<vmem>>, vector<1x8xf32>,
      %cst_76 = arith.constant 0.000000e+00 : f32
      %243 = vector.broadcast %cst_76 : f32 to vector<1x8xf32>
      %c0_77 = arith.constant 0 : index
      %c0_78 = arith.constant 0 : index
      %244 = vector.load %arg10[%c0_77, %c0_78] : memref<1x8xf32, #tpu.memory_space<vmem>>, vector<1x8xf32>
      tpu.vector_store %arg10[%c0_77, %c0_78], %243 {strides = array<i32>} : memref<1x8xf32, #tpu.memory_space<vmem>>, vector<1x8xf32>,
    } else {
    }
    %c0 = arith.constant 0 : index
    %c0_1 = arith.constant 0 : index
    %3 = vector.load %arg4[%c0, %c0_1] : memref<16x16xf32, #tpu.memory_space<vmem>>, vector<16x16xf32>
    %c0_2 = arith.constant 0 : index
    %c0_3 = arith.constant 0 : index
    %4 = vector.load %arg5[%c0_2, %c0_3] : memref<16x1xf32, #tpu.memory_space<vmem>>, vector<16x1xf32>
    %c0_4 = arith.constant 0 : index
    %c0_5 = arith.constant 0 : index
    %5 = vector.load %arg2[%c0_4, %c0_5] : memref<1x8xi32, #tpu.memory_space<vmem>>, vector<1x8xi32>
    %c8_i32 = arith.constant 8 : i32
    %6 = arith.muli %arg1, %c8_i32 : i32
    %7 = vector.broadcast %6 : i32 to vector<1x8xi32>
    %8 = arith.subi %5, %7 : vector<1x8xi32>
    %c0_6 = arith.constant 0 : index
    %c0_7 = arith.constant 0 : index
    %9 = vector.load %arg9[%c0_6, %c0_7] : memref<1x8xf32, #tpu.memory_space<vmem>>, vector<1x8xf32>
    %c0_8 = arith.constant 0 : index
    %c0_9 = arith.constant 0 : index
    %10 = vector.load %arg8[%c0_8, %c0_9] : memref<16x8xf32, #tpu.memory_space<vmem>>, vector<16x8xf32>
    %c0_10 = arith.constant 0 : index
    %c0_11 = arith.constant 0 : index
    %11 = vector.load %arg10[%c0_10, %c0_11] : memref<1x8xf32, #tpu.memory_space<vmem>>, vector<1x8xf32>
    %c0_i32_12 = arith.constant 0 : i32
    %12 = arith.index_cast %c0_i32_12 : i32 to index
    %c0_13 = arith.constant 0 : index
    %c0_14 = arith.constant 0 : index
    %13 = vector.load %arg3[%12, %c0_13, %c0_14] : memref<8x16x8xf32, #tpu.memory_space<vmem>>, vector<1x16x8xf32>
    %14 = vector.shape_cast %13 : vector<1x16x8xf32> to vector<16x8xf32>
    %15 = vector.broadcast %4 : vector<16x1xf32> to vector<16x8xf32>
    %16 = arith.addf %14, %15 : vector<16x8xf32>
    %cst = arith.constant dense<0xFF800000> : vector<8xf32>
    %17 = vector.multi_reduction <maximumf>, %16, %cst [0] : vector<16x8xf32> to vector<8xf32>
    %18 = vector.shape_cast %17 : vector<8xf32> to vector<1x8xf32>
    %cst_15 = arith.constant dense<0.000000e+00> : vector<16x8xf32>
    %19 = tpu.matmul %3, %10, %cst_15 {dimension_numbers = #tpu.dot_dimension_numbers<[1], [0], [0], [1], [0, 0, 1, 1], [], []>} : vector<16x16xf32>, vector<16x8xf32>, vector<16x8xf32> -> vector<16x8xf32>
    %20 = arith.addf %18, %11 : vector<1x8xf32>
    %21 = vector.broadcast %20 : vector<1x8xf32> to vector<16x8xf32>
    %22 = arith.subf %16, %21 : vector<16x8xf32>
    %23 = math.exp %22 : vector<16x8xf32>
    %24 = arith.mulf %23, %19 : vector<16x8xf32>
    %cst_16 = arith.constant dense<0xFF800000> : vector<8xf32>
    %25 = vector.multi_reduction <maximumf>, %24, %cst_16 [0] : vector<16x8xf32> to vector<8xf32>
    %26 = vector.shape_cast %25 : vector<8xf32> to vector<1x8xf32>
    %cst_17 = arith.constant 9.99999991E-38 : f32
    %27 = vector.broadcast %cst_17 : f32 to vector<1x8xf32>
    %28 = arith.maximumf %26, %27 : vector<1x8xf32>
    %29 = math.log %28 : vector<1x8xf32>
    %30 = arith.addf %9, %18 : vector<1x8xf32>
    %31 = arith.addf %30, %11 : vector<1x8xf32>
    %32 = vector.broadcast %c0_i32_12 : i32 to vector<1x8xi32>
    %33 = arith.cmpi sgt, %8, %32 : vector<1x8xi32>
    %34 = arith.select %33, %31, %9 : vector<1x8xi1>, vector<1x8xf32>
    %35 = vector.shape_cast %33 : vector<1x8xi1> to vector<1x8xi1>
    %36 = vector.broadcast %35 : vector<1x8xi1> to vector<16x8xi1>
    %37 = arith.select %36, %24, %10 : vector<16x8xi1>, vector<16x8xf32>
    %38 = arith.select %33, %29, %11 : vector<1x8xi1>, vector<1x8xf32>
    %c1_i32 = arith.constant 1 : i32
    %39 = arith.index_cast %c1_i32 : i32 to index
    %c0_18 = arith.constant 0 : index
    %c0_19 = arith.constant 0 : index
    %40 = vector.load %arg3[%39, %c0_18, %c0_19] : memref<8x16x8xf32, #tpu.memory_space<vmem>>, vector<1x16x8xf32>
    %41 = vector.shape_cast %40 : vector<1x16x8xf32> to vector<16x8xf32>
    %42 = vector.broadcast %4 : vector<16x1xf32> to vector<16x8xf32>
    %43 = arith.addf %41, %42 : vector<16x8xf32>
    %cst_20 = arith.constant dense<0xFF800000> : vector<8xf32>
    %44 = vector.multi_reduction <maximumf>, %43, %cst_20 [0] : vector<16x8xf32> to vector<8xf32>
    %45 = vector.shape_cast %44 : vector<8xf32> to vector<1x8xf32>
    %cst_21 = arith.constant dense<0.000000e+00> : vector<16x8xf32>
    %46 = tpu.matmul %3, %37, %cst_21 {dimension_numbers = #tpu.dot_dimension_numbers<[1], [0], [0], [1], [0, 0, 1, 1], [], []>} : vector<16x16xf32>, vector<16x8xf32>, vector<16x8xf32> -> vector<16x8xf32>
    %47 = arith.addf %45, %38 : vector<1x8xf32>
    %48 = vector.broadcast %47 : vector<1x8xf32> to vector<16x8xf32>
    %49 = arith.subf %43, %48 : vector<16x8xf32>
    %50 = math.exp %49 : vector<16x8xf32>
    %51 = arith.mulf %50, %46 : vector<16x8xf32>
    %cst_22 = arith.constant dense<0xFF800000> : vector<8xf32>
    %52 = vector.multi_reduction <maximumf>, %51, %cst_22 [0] : vector<16x8xf32> to vector<8xf32>
    %53 = vector.shape_cast %52 : vector<8xf32> to vector<1x8xf32>
    %cst_23 = arith.constant 9.99999991E-38 : f32
    %54 = vector.broadcast %cst_23 : f32 to vector<1x8xf32>
    %55 = arith.maximumf %53, %54 : vector<1x8xf32>
    %56 = math.log %55 : vector<1x8xf32>
    %57 = arith.addf %34, %45 : vector<1x8xf32>
    %58 = arith.addf %57, %38 : vector<1x8xf32>
    %59 = vector.broadcast %c1_i32 : i32 to vector<1x8xi32>
    %60 = arith.cmpi sgt, %8, %59 : vector<1x8xi32>
    %61 = arith.select %60, %58, %34 : vector<1x8xi1>, vector<1x8xf32>
    %62 = vector.shape_cast %60 : vector<1x8xi1> to vector<1x8xi1>
    %63 = vector.broadcast %62 : vector<1x8xi1> to vector<16x8xi1>
    %64 = arith.select %63, %51, %37 : vector<16x8xi1>, vector<16x8xf32>
    %65 = arith.select %60, %56, %38 : vector<1x8xi1>, vector<1x8xf32>
    %c2_i32 = arith.constant 2 : i32
    %66 = arith.index_cast %c2_i32 : i32 to index
    %c0_24 = arith.constant 0 : index
    %c0_25 = arith.constant 0 : index
    %67 = vector.load %arg3[%66, %c0_24, %c0_25] : memref<8x16x8xf32, #tpu.memory_space<vmem>>, vector<1x16x8xf32>
    %68 = vector.shape_cast %67 : vector<1x16x8xf32> to vector<16x8xf32>
    %69 = vector.broadcast %4 : vector<16x1xf32> to vector<16x8xf32>
    %70 = arith.addf %68, %69 : vector<16x8xf32>
    %cst_26 = arith.constant dense<0xFF800000> : vector<8xf32>
    %71 = vector.multi_reduction <maximumf>, %70, %cst_26 [0] : vector<16x8xf32> to vector<8xf32>
    %72 = vector.shape_cast %71 : vector<8xf32> to vector<1x8xf32>
    %cst_27 = arith.constant dense<0.000000e+00> : vector<16x8xf32>
    %73 = tpu.matmul %3, %64, %cst_27 {dimension_numbers = #tpu.dot_dimension_numbers<[1], [0], [0], [1], [0, 0, 1, 1], [], []>} : vector<16x16xf32>, vector<16x8xf32>, vector<16x8xf32> -> vector<16x8xf32>
    %74 = arith.addf %72, %65 : vector<1x8xf32>
    %75 = vector.broadcast %74 : vector<1x8xf32> to vector<16x8xf32>
    %76 = arith.subf %70, %75 : vector<16x8xf32>
    %77 = math.exp %76 : vector<16x8xf32>
    %78 = arith.mulf %77, %73 : vector<16x8xf32>
    %cst_28 = arith.constant dense<0xFF800000> : vector<8xf32>
    %79 = vector.multi_reduction <maximumf>, %78, %cst_28 [0] : vector<16x8xf32> to vector<8xf32>
    %80 = vector.shape_cast %79 : vector<8xf32> to vector<1x8xf32>
    %cst_29 = arith.constant 9.99999991E-38 : f32
    %81 = vector.broadcast %cst_29 : f32 to vector<1x8xf32>
    %82 = arith.maximumf %80, %81 : vector<1x8xf32>
    %83 = math.log %82 : vector<1x8xf32>
    %84 = arith.addf %61, %72 : vector<1x8xf32>
    %85 = arith.addf %84, %65 : vector<1x8xf32>
    %86 = vector.broadcast %c2_i32 : i32 to vector<1x8xi32>
    %87 = arith.cmpi sgt, %8, %86 : vector<1x8xi32>
    %88 = arith.select %87, %85, %61 : vector<1x8xi1>, vector<1x8xf32>
    %89 = vector.shape_cast %87 : vector<1x8xi1> to vector<1x8xi1>
    %90 = vector.broadcast %89 : vector<1x8xi1> to vector<16x8xi1>
    %91 = arith.select %90, %78, %64 : vector<16x8xi1>, vector<16x8xf32>
    %92 = arith.select %87, %83, %65 : vector<1x8xi1>, vector<1x8xf32>
    %c3_i32 = arith.constant 3 : i32
    %93 = arith.index_cast %c3_i32 : i32 to index
    %c0_30 = arith.constant 0 : index
    %c0_31 = arith.constant 0 : index
    %94 = vector.load %arg3[%93, %c0_30, %c0_31] : memref<8x16x8xf32, #tpu.memory_space<vmem>>, vector<1x16x8xf32>
    %95 = vector.shape_cast %94 : vector<1x16x8xf32> to vector<16x8xf32>
    %96 = vector.broadcast %4 : vector<16x1xf32> to vector<16x8xf32>
    %97 = arith.addf %95, %96 : vector<16x8xf32>
    %cst_32 = arith.constant dense<0xFF800000> : vector<8xf32>
    %98 = vector.multi_reduction <maximumf>, %97, %cst_32 [0] : vector<16x8xf32> to vector<8xf32>
    %99 = vector.shape_cast %98 : vector<8xf32> to vector<1x8xf32>
    %cst_33 = arith.constant dense<0.000000e+00> : vector<16x8xf32>
    %100 = tpu.matmul %3, %91, %cst_33 {dimension_numbers = #tpu.dot_dimension_numbers<[1], [0], [0], [1], [0, 0, 1, 1], [], []>} : vector<16x16xf32>, vector<16x8xf32>, vector<16x8xf32> -> vector<16x8xf32>
    %101 = arith.addf %99, %92 : vector<1x8xf32>
    %102 = vector.broadcast %101 : vector<1x8xf32> to vector<16x8xf32>
    %103 = arith.subf %97, %102 : vector<16x8xf32>
    %104 = math.exp %103 : vector<16x8xf32>
    %105 = arith.mulf %104, %100 : vector<16x8xf32>
    %cst_34 = arith.constant dense<0xFF800000> : vector<8xf32>
    %106 = vector.multi_reduction <maximumf>, %105, %cst_34 [0] : vector<16x8xf32> to vector<8xf32>
    %107 = vector.shape_cast %106 : vector<8xf32> to vector<1x8xf32>
    %cst_35 = arith.constant 9.99999991E-38 : f32
    %108 = vector.broadcast %cst_35 : f32 to vector<1x8xf32>
    %109 = arith.maximumf %107, %108 : vector<1x8xf32>
    %110 = math.log %109 : vector<1x8xf32>
    %111 = arith.addf %88, %99 : vector<1x8xf32>
    %112 = arith.addf %111, %92 : vector<1x8xf32>
    %113 = vector.broadcast %c3_i32 : i32 to vector<1x8xi32>
    %114 = arith.cmpi sgt, %8, %113 : vector<1x8xi32>
    %115 = arith.select %114, %112, %88 : vector<1x8xi1>, vector<1x8xf32>
    %116 = vector.shape_cast %114 : vector<1x8xi1> to vector<1x8xi1>
    %117 = vector.broadcast %116 : vector<1x8xi1> to vector<16x8xi1>
    %118 = arith.select %117, %105, %91 : vector<16x8xi1>, vector<16x8xf32>
    %119 = arith.select %114, %110, %92 : vector<1x8xi1>, vector<1x8xf32>
    %c4_i32 = arith.constant 4 : i32
    %120 = arith.index_cast %c4_i32 : i32 to index
    %c0_36 = arith.constant 0 : index
    %c0_37 = arith.constant 0 : index
    %121 = vector.load %arg3[%120, %c0_36, %c0_37] : memref<8x16x8xf32, #tpu.memory_space<vmem>>, vector<1x16x8xf32>
    %122 = vector.shape_cast %121 : vector<1x16x8xf32> to vector<16x8xf32>
    %123 = vector.broadcast %4 : vector<16x1xf32> to vector<16x8xf32>
    %124 = arith.addf %122, %123 : vector<16x8xf32>
    %cst_38 = arith.constant dense<0xFF800000> : vector<8xf32>
    %125 = vector.multi_reduction <maximumf>, %124, %cst_38 [0] : vector<16x8xf32> to vector<8xf32>
    %126 = vector.shape_cast %125 : vector<8xf32> to vector<1x8xf32>
    %cst_39 = arith.constant dense<0.000000e+00> : vector<16x8xf32>
    %127 = tpu.matmul %3, %118, %cst_39 {dimension_numbers = #tpu.dot_dimension_numbers<[1], [0], [0], [1], [0, 0, 1, 1], [], []>} : vector<16x16xf32>, vector<16x8xf32>, vector<16x8xf32> -> vector<16x8xf32>
    %128 = arith.addf %126, %119 : vector<1x8xf32>
    %129 = vector.broadcast %128 : vector<1x8xf32> to vector<16x8xf32>
    %130 = arith.subf %124, %129 : vector<16x8xf32>
    %131 = math.exp %130 : vector<16x8xf32>
    %132 = arith.mulf %131, %127 : vector<16x8xf32>
    %cst_40 = arith.constant dense<0xFF800000> : vector<8xf32>
    %133 = vector.multi_reduction <maximumf>, %132, %cst_40 [0] : vector<16x8xf32> to vector<8xf32>
    %134 = vector.shape_cast %133 : vector<8xf32> to vector<1x8xf32>
    %cst_41 = arith.constant 9.99999991E-38 : f32
    %135 = vector.broadcast %cst_41 : f32 to vector<1x8xf32>
    %136 = arith.maximumf %134, %135 : vector<1x8xf32>
    %137 = math.log %136 : vector<1x8xf32>
    %138 = arith.addf %115, %126 : vector<1x8xf32>
    %139 = arith.addf %138, %119 : vector<1x8xf32>
    %140 = vector.broadcast %c4_i32 : i32 to vector<1x8xi32>
    %141 = arith.cmpi sgt, %8, %140 : vector<1x8xi32>
    %142 = arith.select %141, %139, %115 : vector<1x8xi1>, vector<1x8xf32>
    %143 = vector.shape_cast %141 : vector<1x8xi1> to vector<1x8xi1>
    %144 = vector.broadcast %143 : vector<1x8xi1> to vector<16x8xi1>
    %145 = arith.select %144, %132, %118 : vector<16x8xi1>, vector<16x8xf32>
    %146 = arith.select %141, %137, %119 : vector<1x8xi1>, vector<1x8xf32>
    %c5_i32 = arith.constant 5 : i32
    %147 = arith.index_cast %c5_i32 : i32 to index
    %c0_42 = arith.constant 0 : index
    %c0_43 = arith.constant 0 : index
    %148 = vector.load %arg3[%147, %c0_42, %c0_43] : memref<8x16x8xf32, #tpu.memory_space<vmem>>, vector<1x16x8xf32>
    %149 = vector.shape_cast %148 : vector<1x16x8xf32> to vector<16x8xf32>
    %150 = vector.broadcast %4 : vector<16x1xf32> to vector<16x8xf32>
    %151 = arith.addf %149, %150 : vector<16x8xf32>
    %cst_44 = arith.constant dense<0xFF800000> : vector<8xf32>
    %152 = vector.multi_reduction <maximumf>, %151, %cst_44 [0] : vector<16x8xf32> to vector<8xf32>
    %153 = vector.shape_cast %152 : vector<8xf32> to vector<1x8xf32>
    %cst_45 = arith.constant dense<0.000000e+00> : vector<16x8xf32>
    %154 = tpu.matmul %3, %145, %cst_45 {dimension_numbers = #tpu.dot_dimension_numbers<[1], [0], [0], [1], [0, 0, 1, 1], [], []>} : vector<16x16xf32>, vector<16x8xf32>, vector<16x8xf32> -> vector<16x8xf32>
    %155 = arith.addf %153, %146 : vector<1x8xf32>
    %156 = vector.broadcast %155 : vector<1x8xf32> to vector<16x8xf32>
    %157 = arith.subf %151, %156 : vector<16x8xf32>
    %158 = math.exp %157 : vector<16x8xf32>
    %159 = arith.mulf %158, %154 : vector<16x8xf32>
    %cst_46 = arith.constant dense<0xFF800000> : vector<8xf32>
    %160 = vector.multi_reduction <maximumf>, %159, %cst_46 [0] : vector<16x8xf32> to vector<8xf32>
    %161 = vector.shape_cast %160 : vector<8xf32> to vector<1x8xf32>
    %cst_47 = arith.constant 9.99999991E-38 : f32
    %162 = vector.broadcast %cst_47 : f32 to vector<1x8xf32>
    %163 = arith.maximumf %161, %162 : vector<1x8xf32>
    %164 = math.log %163 : vector<1x8xf32>
    %165 = arith.addf %142, %153 : vector<1x8xf32>
    %166 = arith.addf %165, %146 : vector<1x8xf32>
    %167 = vector.broadcast %c5_i32 : i32 to vector<1x8xi32>
    %168 = arith.cmpi sgt, %8, %167 : vector<1x8xi32>
    %169 = arith.select %168, %166, %142 : vector<1x8xi1>, vector<1x8xf32>
    %170 = vector.shape_cast %168 : vector<1x8xi1> to vector<1x8xi1>
    %171 = vector.broadcast %170 : vector<1x8xi1> to vector<16x8xi1>
    %172 = arith.select %171, %159, %145 : vector<16x8xi1>, vector<16x8xf32>
    %173 = arith.select %168, %164, %146 : vector<1x8xi1>, vector<1x8xf32>
    %c6_i32 = arith.constant 6 : i32
    %174 = arith.index_cast %c6_i32 : i32 to index
    %c0_48 = arith.constant 0 : index
    %c0_49 = arith.constant 0 : index
    %175 = vector.load %arg3[%174, %c0_48, %c0_49] : memref<8x16x8xf32, #tpu.memory_space<vmem>>, vector<1x16x8xf32>
    %176 = vector.shape_cast %175 : vector<1x16x8xf32> to vector<16x8xf32>
    %177 = vector.broadcast %4 : vector<16x1xf32> to vector<16x8xf32>
    %178 = arith.addf %176, %177 : vector<16x8xf32>
    %cst_50 = arith.constant dense<0xFF800000> : vector<8xf32>
    %179 = vector.multi_reduction <maximumf>, %178, %cst_50 [0] : vector<16x8xf32> to vector<8xf32>
    %180 = vector.shape_cast %179 : vector<8xf32> to vector<1x8xf32>
    %cst_51 = arith.constant dense<0.000000e+00> : vector<16x8xf32>
    %181 = tpu.matmul %3, %172, %cst_51 {dimension_numbers = #tpu.dot_dimension_numbers<[1], [0], [0], [1], [0, 0, 1, 1], [], []>} : vector<16x16xf32>, vector<16x8xf32>, vector<16x8xf32> -> vector<16x8xf32>
    %182 = arith.addf %180, %173 : vector<1x8xf32>
    %183 = vector.broadcast %182 : vector<1x8xf32> to vector<16x8xf32>
    %184 = arith.subf %178, %183 : vector<16x8xf32>
    %185 = math.exp %184 : vector<16x8xf32>
    %186 = arith.mulf %185, %181 : vector<16x8xf32>
    %cst_52 = arith.constant dense<0xFF800000> : vector<8xf32>
    %187 = vector.multi_reduction <maximumf>, %186, %cst_52 [0] : vector<16x8xf32> to vector<8xf32>
    %188 = vector.shape_cast %187 : vector<8xf32> to vector<1x8xf32>
    %cst_53 = arith.constant 9.99999991E-38 : f32
    %189 = vector.broadcast %cst_53 : f32 to vector<1x8xf32>
    %190 = arith.maximumf %188, %189 : vector<1x8xf32>
    %191 = math.log %190 : vector<1x8xf32>
    %192 = arith.addf %169, %180 : vector<1x8xf32>
    %193 = arith.addf %192, %173 : vector<1x8xf32>
    %194 = vector.broadcast %c6_i32 : i32 to vector<1x8xi32>
    %195 = arith.cmpi sgt, %8, %194 : vector<1x8xi32>
    %196 = arith.select %195, %193, %169 : vector<1x8xi1>, vector<1x8xf32>
    %197 = vector.shape_cast %195 : vector<1x8xi1> to vector<1x8xi1>
    %198 = vector.broadcast %197 : vector<1x8xi1> to vector<16x8xi1>
    %199 = arith.select %198, %186, %172 : vector<16x8xi1>, vector<16x8xf32>
    %200 = arith.select %195, %191, %173 : vector<1x8xi1>, vector<1x8xf32>
    %c7_i32 = arith.constant 7 : i32
    %201 = arith.index_cast %c7_i32 : i32 to index
    %c0_54 = arith.constant 0 : index
    %c0_55 = arith.constant 0 : index
    %202 = vector.load %arg3[%201, %c0_54, %c0_55] : memref<8x16x8xf32, #tpu.memory_space<vmem>>, vector<1x16x8xf32>
    %203 = vector.shape_cast %202 : vector<1x16x8xf32> to vector<16x8xf32>
    %204 = vector.broadcast %4 : vector<16x1xf32> to vector<16x8xf32>
    %205 = arith.addf %203, %204 : vector<16x8xf32>
    %cst_56 = arith.constant dense<0xFF800000> : vector<8xf32>
    %206 = vector.multi_reduction <maximumf>, %205, %cst_56 [0] : vector<16x8xf32> to vector<8xf32>
    %207 = vector.shape_cast %206 : vector<8xf32> to vector<1x8xf32>
    %cst_57 = arith.constant dense<0.000000e+00> : vector<16x8xf32>
    %208 = tpu.matmul %3, %199, %cst_57 {dimension_numbers = #tpu.dot_dimension_numbers<[1], [0], [0], [1], [0, 0, 1, 1], [], []>} : vector<16x16xf32>, vector<16x8xf32>, vector<16x8xf32> -> vector<16x8xf32>
    %209 = arith.addf %207, %200 : vector<1x8xf32>
    %210 = vector.broadcast %209 : vector<1x8xf32> to vector<16x8xf32>
    %211 = arith.subf %205, %210 : vector<16x8xf32>
    %212 = math.exp %211 : vector<16x8xf32>
    %213 = arith.mulf %212, %208 : vector<16x8xf32>
    %cst_58 = arith.constant dense<0xFF800000> : vector<8xf32>
    %214 = vector.multi_reduction <maximumf>, %213, %cst_58 [0] : vector<16x8xf32> to vector<8xf32>
    %215 = vector.shape_cast %214 : vector<8xf32> to vector<1x8xf32>
    %cst_59 = arith.constant 9.99999991E-38 : f32
    %216 = vector.broadcast %cst_59 : f32 to vector<1x8xf32>
    %217 = arith.maximumf %215, %216 : vector<1x8xf32>
    %218 = math.log %217 : vector<1x8xf32>
    %219 = arith.addf %196, %207 : vector<1x8xf32>
    %220 = arith.addf %219, %200 : vector<1x8xf32>
    %221 = vector.broadcast %c7_i32 : i32 to vector<1x8xi32>
    %222 = arith.cmpi sgt, %8, %221 : vector<1x8xi32>
    %223 = arith.select %222, %220, %196 : vector<1x8xi1>, vector<1x8xf32>
    %224 = vector.shape_cast %222 : vector<1x8xi1> to vector<1x8xi1>
    %225 = vector.broadcast %224 : vector<1x8xi1> to vector<16x8xi1>
    %226 = arith.select %225, %213, %199 : vector<16x8xi1>, vector<16x8xf32>
    %227 = arith.select %222, %218, %200 : vector<1x8xi1>, vector<1x8xf32>
    %c8_i32_60 = arith.constant 8 : i32
    %c0_61 = arith.constant 0 : index
    %c0_62 = arith.constant 0 : index
    %228 = vector.load %arg9[%c0_61, %c0_62] : memref<1x8xf32, #tpu.memory_space<vmem>>, vector<1x8xf32>
    tpu.vector_store %arg9[%c0_61, %c0_62], %223 {strides = array<i32>} : memref<1x8xf32, #tpu.memory_space<vmem>>, vector<1x8xf32>,
    %c0_63 = arith.constant 0 : index
    %c0_64 = arith.constant 0 : index
    %229 = vector.load %arg8[%c0_63, %c0_64] : memref<16x8xf32, #tpu.memory_space<vmem>>, vector<16x8xf32>
    tpu.vector_store %arg8[%c0_63, %c0_64], %226 {strides = array<i32>} : memref<16x8xf32, #tpu.memory_space<vmem>>, vector<16x8xf32>,
    %c0_65 = arith.constant 0 : index
    %c0_66 = arith.constant 0 : index
    %230 = vector.load %arg10[%c0_65, %c0_66] : memref<1x8xf32, #tpu.memory_space<vmem>>, vector<1x8xf32>
    tpu.vector_store %arg10[%c0_65, %c0_66], %227 {strides = array<i32>} : memref<1x8xf32, #tpu.memory_space<vmem>>, vector<1x8xf32>,
    %c0_i32_67 = arith.constant 0 : i32
    %231 = arith.cmpi eq, %arg1, %c0_i32_67 : i32
    %232 = arith.extui %231 : i1 to i32
    %c0_i32_68 = arith.constant 0 : i32
    %233 = arith.cmpi ne, %232, %c0_i32_68 : i32
    scf.if %233 {
      %c0_69 = arith.constant 0 : index
      %c0_70 = arith.constant 0 : index
      %234 = vector.load %arg6[%c0_69, %c0_70] : memref<16x1xf32, #tpu.memory_space<vmem>>, vector<16x1xf32>
      %235 = vector.broadcast %234 : vector<16x1xf32> to vector<16x8xf32>
      %236 = arith.mulf %226, %235 : vector<16x8xf32>
      %cst_71 = arith.constant dense<0.000000e+00> : vector<8xf32>
      %237 = vector.multi_reduction <add>, %236, %cst_71 [0] : vector<16x8xf32> to vector<8xf32>
      %238 = vector.shape_cast %237 : vector<8xf32> to vector<1x8xf32>
      %cst_72 = arith.constant 9.99999991E-38 : f32
      %239 = vector.broadcast %cst_72 : f32 to vector<1x8xf32>
      %240 = arith.maximumf %238, %239 : vector<1x8xf32>
      %241 = math.log %240 : vector<1x8xf32>
      %242 = arith.addf %223, %241 : vector<1x8xf32>
      %c0_73 = arith.constant 0 : index
      %c0_74 = arith.constant 0 : index
      %243 = vector.load %arg7[%c0_73, %c0_74] : memref<1x8xf32, #tpu.memory_space<vmem>>, vector<1x8xf32>
      tpu.vector_store %arg7[%c0_73, %c0_74], %242 {strides = array<i32>} : memref<1x8xf32, #tpu.memory_space<vmem>>, vector<1x8xf32>,
    } else {
    }
    return
  }
  func.func @transform_0(%arg0: i32, %arg1: i32) -> (i32, i32) {
    %c0_i32 = arith.constant 0 : i32
    %c0_i32_0 = arith.constant 0 : i32
    return %c0_i32, %arg0 : i32, i32
  }
  func.func @transform_1(%arg0: i32, %arg1: i32) -> (i32, i32, i32) {
    %c0_i32 = arith.constant 0 : i32
    %c0_i32_0 = arith.constant 0 : i32
    return %arg1, %c0_i32, %arg0 : i32, i32, i32
  }
  func.func @transform_2(%arg0: i32, %arg1: i32) -> (i32, i32) {
    %c0_i32 = arith.constant 0 : i32
    %c0_i32_0 = arith.constant 0 : i32
    %c0_i32_1 = arith.constant 0 : i32
    return %c0_i32, %c0_i32_0 : i32, i32
  }
  func.func @transform_3(%arg0: i32, %arg1: i32) -> (i32, i32) {
    %c0_i32 = arith.constant 0 : i32
    %c0_i32_0 = arith.constant 0 : i32
    %c0_i32_1 = arith.constant 0 : i32
    return %c0_i32, %c0_i32_0 : i32, i32
  }
  func.func @transform_4(%arg0: i32, %arg1: i32) -> (i32, i32) {
    %c0_i32 = arith.constant 0 : i32
    %c0_i32_0 = arith.constant 0 : i32
    %c0_i32_1 = arith.constant 0 : i32
    return %c0_i32, %c0_i32_0 : i32, i32
  }
  func.func @transform_5(%arg0: i32, %arg1: i32) -> (i32, i32) {
    %c0_i32 = arith.constant 0 : i32
    %c0_i32_0 = arith.constant 0 : i32
    return %c0_i32, %arg0 : i32, i32
  }
}

</mosaic_0001>

<llo_original>
// kernel: tpu_custom_call.1
$region0: #{tpu_custom_call.1}
  #allocation0 [shape = 'u32[]', space=smem, size = 0x4, offset = 0x4, fixed_abs, tag = 'smem constant byte address 0x4 - core index']
  #allocation1 [shape = 'u32[72,128]{1,0:T(1,128)}', space=vmem, size = 0x9000, scoped, tag = 'internal scratch']
  #allocation2 [shape = 'f32[16,8]{1,0:T(8,128)}', space=vmem, size = 0x2000, scoped, tag = 'scratch operand']
  #allocation3 [shape = 'f32[1,8]{1,0:T(1,128)}', space=vmem, size = 0x200, scoped, tag = 'scratch operand']
  #allocation4 [shape = 'f32[1,8]{1,0:T(1,128)}', space=vmem, size = 0x200, scoped, tag = 'scratch operand']
  %s0 = inlined_call_operand.vmem [shape: s32[1,8], index: 0, kind: input, shape index: {}]
  %s1 = inlined_call_operand.vmem [shape: f32[8,16,8], index: 1, kind: input, shape index: {}]
  %s2 = inlined_call_operand.vmem [shape: f32[16,16], index: 2, kind: input, shape index: {}]
  %s3 = inlined_call_operand.vmem [shape: f32[16,1], index: 3, kind: input, shape index: {}]
  %s4 = inlined_call_operand.vmem [shape: f32[16,1], index: 4, kind: input, shape index: {}]
  %s5 = inlined_call_operand.hbm [shape: f32[1,8], index: 5, kind: output, shape index: {}]
  %s6 = sld [smem:[#allocation0]]
  $region38: #{tpu_custom_call.1} parent=0
    _
  %s8 = ssub.s32 1, %s6
  %s9 = scalar_select 0, %s8, %s6
  $region1: #{tpu_custom_call.1} parent=0
    #allocation5 [shape = 'u8[512]{0}', space=vmem, size = 0x400, scoped, tag = 'output window, operand 0, single buffered']
    #allocation6 [shape = 's32[1]{0}', space=sflag, size = 0x4, scoped, tag = 'scoped memory for tpu_custom_call.1']
    %10 = vsyncpa [#allocation6], 0
    // Predicated region
    $region2: #{tpu_custom_call.1} parent=1 // pred_check
      _
    $region3: #{tpu_custom_call.1} parent=1 // pred_check_branch
      %12 = sbr.rel (0) target = $region5
    $region4: #{tpu_custom_call.1} parent=1 // pred_region
      _
    $region5: #{tpu_custom_call.1} parent=1 // pred_fallthru
      _
    // Predicated region
    $region6: #{tpu_custom_call.1} parent=1 // pred_check
      _
    $region7: #{tpu_custom_call.1} parent=1 // pred_check_branch
      %14 = sbr.rel (0) target = $region9
    $region8: #{tpu_custom_call.1} parent=1 // pred_region
      _
    $region9: #{tpu_custom_call.1} parent=1 // pred_fallthru
      _
    // Predicated region
    $region10: #{tpu_custom_call.1} parent=1 // pred_check
      _
    $region11: #{tpu_custom_call.1} parent=1 // pred_check_branch
      %16 = sbr.rel (0) target = $region13
    $region12: #{tpu_custom_call.1} parent=1 // pred_region
      _
    $region13: #{tpu_custom_call.1} parent=1 // pred_fallthru
      _
    // Predicated region
    $region14: #{tpu_custom_call.1} parent=1 // pred_check
      _
    $region15: #{tpu_custom_call.1} parent=1 // pred_check_branch
      %18 = sbr.rel (0) target = $region17
    $region16: #{tpu_custom_call.1} parent=1 // pred_region
      _
    $region17: #{tpu_custom_call.1} parent=1 // pred_fallthru
      _
    // Predicated region
    $region18: #{tpu_custom_call.1} parent=1 // pred_check
      _
    $region19: #{tpu_custom_call.1} parent=1 // pred_check_branch
      %20 = sbr.rel (0) target = $region21
    $region20: #{tpu_custom_call.1} parent=1 // pred_region
      _
    $region21: #{tpu_custom_call.1} parent=1 // pred_fallthru
      _
    %p21 = scmp.eq.s32.totalorder 0, 0
    // Predicated region
    $region22: #{tpu_custom_call.1} parent=1 // pred_check
      %p22 = pneg %p21
    $region23: #{tpu_custom_call.1} parent=1 // pred_check_branch
      %24 = sbr.rel (%p22) target = $region25
    $region24: #{tpu_custom_call.1} parent=1 // pred_region
      %v25 = vlaneseq
      %v26 = vshrl.u32 %v25, 7
      %v27 = vadd.s32 %v26, 8
      %vm28 = vcmp.eq.s32.totalorder %v26, 14
      %vm29 = vcmp.eq.s32.totalorder %v27, 14
      %v30 = vsel %vm28, 1.0, 0.0
      %v31 = vsel %vm29, 1.0, 0.0
      %vm32 = vcmask 64512
      %33 = vst.msk [vmem:[#allocation2] sm:$0xff] %vm32, %v30
      %34 = vst.msk [vmem:[#allocation2 + $0x8] sm:$0xff] %vm32, %v31
      %vm35 = vcmask 57344
      %36 = vst.msk [vmem:[#allocation3] sm:$0x1] %vm35, 0.0
      %37 = vst.msk [vmem:[#allocation4] sm:$0x1] %vm35, 0.0
    $region25: #{tpu_custom_call.1} parent=1 // pred_fallthru
      _
    %v38 = vld [vmem:[%s2] sm:$0xff]
    %v39 = vld [vmem:[%s2 + $0x8] sm:$0xff]
    %v40 = vld [vmem:[%s3] sm:$0xff]
    %v41 = vld [vmem:[%s3 + $0x8] sm:$0xff]
    %v42 = vld [vmem:[%s0] sm:$0x1]
    %s43 = smul.u32 0, 8
    %v44 = vstv %s43
    %v45 = vsub.s32 %v42, %v44
    %v46 = vld [vmem:[#allocation3] sm:$0x1]
    %v47 = vld [vmem:[#allocation2] sm:$0xff]
    %v48 = vld [vmem:[#allocation2 + $0x8] sm:$0xff]
    %v49 = vld [vmem:[#allocation4] sm:$0x1]
    %v50 = vld [vmem:[%s1] sm:$0xff]
    %v51 = vld [vmem:[%s1 + $0x8] sm:$0xff]
    %53 = vset.pattern.permute.xlu0 0
    %54 = vperm.xlu0 %53, %v40
    %v55 = vpop.permute.xlu0 %54
    %58 = vset.pattern.permute.xlu0 0
    %59 = vperm.xlu0 %58, %v41
    %v60 = vpop.permute.xlu0 %59
    %v62 = vadd.f32 %v50, %v55
    %v63 = vadd.f32 %v51, %v60
    %vm64 = vcmask 64512
    %v65 = vsel %vm64, %v62, -inf
    %v66 = vsel %vm64, %v63, -inf
    %v67 = vmax.f32 %v65, %v66
    %v68 = vrot.slane %v67, 4
    %v69 = vmax.f32 %v67, %v68
    %v70 = vrot.slane %v69, 2
    %v71 = vmax.f32 %v69, %v70
    %v72 = vrot.slane %v71, 1
    %v73 = vmax.f32 %v71, %v72
    %vm74 = vcmask 130048
    %v76 = vsel %vm74, %v38, 0
    %v79 = vsel %vm74, %v39, 0
    %81 = vmatpush.msra.mxu0 0.0
    %82 = vmatpush.msra.mxu0 0.0
    %83 = vmatpush.msra.mxu0 0.0
    %84 = vmatpush.msra.mxu0 0.0
    %85 = vmatpush.msra.mxu0 0.0
    %86 = vmatpush.msra.mxu0 0.0
    %87 = vmatpush.msra.mxu0 0.0
    %88 = vmatpush.msra.mxu0 0.0
    %89 = vmatpush.msra.mxu0 0.0
    %90 = vmatpush.msra.mxu0 0.0
    %91 = vmatpush.msra.mxu0 0.0
    %92 = vmatpush.msra.mxu0 0.0
    %93 = vmatpush.msra.mxu0 0.0
    %94 = vmatpush.msra.mxu0 0.0
    %95 = vmatpush.msra.mxu0 %v48
    %96 = vmatpush.msra.mxu0 %v47
    %97 = vmatmul.f32.gmra.mxu0 %v76
    %v98 = vpop.f32.mrf.mxu0
    %v99 = vadd.f32 0.0, %v98
    %100 = vmatmul.f32.gmra.mxu0 %v79
    %v101 = vpop.f32.mrf.mxu0
    %v102 = vadd.f32 0.0, %v101
    %103 = vdwg.mxu0
    %v104 = vadd.f32 %v73, %v49
    %v105 = vperm.slane %v104, 0
    %v106 = vsub.f32 %v62, %v105
    %v107 = vsub.f32 %v63, %v105
    %v108 = vmul.f32 %v106, 1.442695
    %v109 = vpow.pop %v108
    %v110 = vmul.f32 %v107, 1.442695
    %v111 = vpow.pop %v110
    %v112 = vmul.f32 %v109, %v99
    %v113 = vmul.f32 %v111, %v102
    %v114 = vsel %vm64, %v112, -inf
    %v115 = vsel %vm64, %v113, -inf
    %v116 = vmax.f32 %v114, %v115
    %v117 = vrot.slane %v116, 4
    %v118 = vmax.f32 %v116, %v117
    %v119 = vrot.slane %v118, 2
    %v120 = vmax.f32 %v118, %v119
    %v121 = vrot.slane %v120, 1
    %v122 = vmax.f32 %v120, %v121
    %v123 = vmax.f32 %v122, 1e-37
    %v124 = vlog2.pop %v123
    %v125 = vmul.f32 %v124, 0.6931472
    %v126 = vadd.f32 %v46, %v73
    %v127 = vadd.f32 %v126, %v49
    %vm128 = vcmp.gt.s32.totalorder %v45, 0
    %v129 = vsel %vm128, %v127, %v46
    %v130 = vsel %vm128, 1, 0
    %v131 = vperm.slane %v130, 0
    %vm132 = vcmp.eq.s32.totalorder %v131, 1
    %v133 = vsel %vm132, %v112, %v47
    %v134 = vsel %vm132, %v113, %v48
    %v135 = vsel %vm128, %v125, %v49
    %s136 = scalar_lea.vmem %s1, 16
    %v137 = vld [vmem:[%s136] sm:$0xff]
    %v138 = vld [vmem:[%s136 + $0x8] sm:$0xff]
    %v139 = vadd.f32 %v137, %v55
    %v140 = vadd.f32 %v138, %v60
    %v141 = vsel %vm64, %v139, -inf
    %v142 = vsel %vm64, %v140, -inf
    %v143 = vmax.f32 %v141, %v142
    %v144 = vrot.slane %v143, 4
    %v145 = vmax.f32 %v143, %v144
    %v146 = vrot.slane %v145, 2
    %v147 = vmax.f32 %v145, %v146
    %v148 = vrot.slane %v147, 1
    %v149 = vmax.f32 %v147, %v148
    %150 = vmatpush.msra.mxu0 0.0
    %151 = vmatpush.msra.mxu0 0.0
    %152 = vmatpush.msra.mxu0 0.0
    %153 = vmatpush.msra.mxu0 0.0
    %154 = vmatpush.msra.mxu0 0.0
    %155 = vmatpush.msra.mxu0 0.0
    %156 = vmatpush.msra.mxu0 0.0
    %157 = vmatpush.msra.mxu0 0.0
    %158 = vmatpush.msra.mxu0 0.0
    %159 = vmatpush.msra.mxu0 0.0
    %160 = vmatpush.msra.mxu0 0.0
    %161 = vmatpush.msra.mxu0 0.0
    %162 = vmatpush.msra.mxu0 0.0
    %163 = vmatpush.msra.mxu0 0.0
    %164 = vmatpush.msra.mxu0 %v134
    %165 = vmatpush.msra.mxu0 %v133
    %166 = vmatmul.f32.gmra.mxu0 %v76
    %v167 = vpop.f32.mrf.mxu0
    %v168 = vadd.f32 0.0, %v167
    %169 = vmatmul.f32.gmra.mxu0 %v79
    %v170 = vpop.f32.mrf.mxu0
    %v171 = vadd.f32 0.0, %v170
    %172 = vdwg.mxu0
    %v173 = vadd.f32 %v149, %v135
    %v174 = vperm.slane %v173, 0
    %v175 = vsub.f32 %v139, %v174
    %v176 = vsub.f32 %v140, %v174
    %v177 = vmul.f32 %v175, 1.442695
    %v178 = vpow.pop %v177
    %v179 = vmul.f32 %v176, 1.442695
    %v180 = vpow.pop %v179
    %v181 = vmul.f32 %v178, %v168
    %v182 = vmul.f32 %v180, %v171
    %v183 = vsel %vm64, %v181, -inf
    %v184 = vsel %vm64, %v182, -inf
    %v185 = vmax.f32 %v183, %v184
    %v186 = vrot.slane %v185, 4
    %v187 = vmax.f32 %v185, %v186
    %v188 = vrot.slane %v187, 2
    %v189 = vmax.f32 %v187, %v188
    %v190 = vrot.slane %v189, 1
    %v191 = vmax.f32 %v189, %v190
    %v192 = vmax.f32 %v191, 1e-37
    %v193 = vlog2.pop %v192
    %v194 = vmul.f32 %v193, 0.6931472
    %v195 = vadd.f32 %v129, %v149
    %v196 = vadd.f32 %v195, %v135
    %vm197 = vcmp.gt.s32.totalorder %v45, 1
    %v198 = vsel %vm197, %v196, %v129
    %v199 = vsel %vm197, 1, 0
    %v200 = vperm.slane %v199, 0
    %vm201 = vcmp.eq.s32.totalorder %v200, 1
    %v202 = vsel %vm201, %v181, %v133
    %v203 = vsel %vm201, %v182, %v134
    %v204 = vsel %vm197, %v194, %v135
    %s205 = scalar_lea.vmem %s1, 32
    %v206 = vld [vmem:[%s205] sm:$0xff]
    %v207 = vld [vmem:[%s205 + $0x8] sm:$0xff]
    %v208 = vadd.f32 %v206, %v55
    %v209 = vadd.f32 %v207, %v60
    %v210 = vsel %vm64, %v208, -inf
    %v211 = vsel %vm64, %v209, -inf
    %v212 = vmax.f32 %v210, %v211
    %v213 = vrot.slane %v212, 4
    %v214 = vmax.f32 %v212, %v213
    %v215 = vrot.slane %v214, 2
    %v216 = vmax.f32 %v214, %v215
    %v217 = vrot.slane %v216, 1
    %v218 = vmax.f32 %v216, %v217
    %219 = vmatpush.msra.mxu0 0.0
    %220 = vmatpush.msra.mxu0 0.0
    %221 = vmatpush.msra.mxu0 0.0
    %222 = vmatpush.msra.mxu0 0.0
    %223 = vmatpush.msra.mxu0 0.0
    %224 = vmatpush.msra.mxu0 0.0
    %225 = vmatpush.msra.mxu0 0.0
    %226 = vmatpush.msra.mxu0 0.0
    %227 = vmatpush.msra.mxu0 0.0
    %228 = vmatpush.msra.mxu0 0.0
    %229 = vmatpush.msra.mxu0 0.0
    %230 = vmatpush.msra.mxu0 0.0
    %231 = vmatpush.msra.mxu0 0.0
    %232 = vmatpush.msra.mxu0 0.0
    %233 = vmatpush.msra.mxu0 %v203
    %234 = vmatpush.msra.mxu0 %v202
    %235 = vmatmul.f32.gmra.mxu0 %v76
    %v236 = vpop.f32.mrf.mxu0
    %v237 = vadd.f32 0.0, %v236
    %238 = vmatmul.f32.gmra.mxu0 %v79
    %v239 = vpop.f32.mrf.mxu0
    %v240 = vadd.f32 0.0, %v239
    %241 = vdwg.mxu0
    %v242 = vadd.f32 %v218, %v204
    %v243 = vperm.slane %v242, 0
    %v244 = vsub.f32 %v208, %v243
    %v245 = vsub.f32 %v209, %v243
    %v246 = vmul.f32 %v244, 1.442695
    %v247 = vpow.pop %v246
    %v248 = vmul.f32 %v245, 1.442695
    %v249 = vpow.pop %v248
    %v250 = vmul.f32 %v247, %v237
    %v251 = vmul.f32 %v249, %v240
    %v252 = vsel %vm64, %v250, -inf
    %v253 = vsel %vm64, %v251, -inf
    %v254 = vmax.f32 %v252, %v253
    %v255 = vrot.slane %v254, 4
    %v256 = vmax.f32 %v254, %v255
    %v257 = vrot.slane %v256, 2
    %v258 = vmax.f32 %v256, %v257
    %v259 = vrot.slane %v258, 1
    %v260 = vmax.f32 %v258, %v259
    %v261 = vmax.f32 %v260, 1e-37
    %v262 = vlog2.pop %v261
    %v263 = vmul.f32 %v262, 0.6931472
    %v264 = vadd.f32 %v198, %v218
    %v265 = vadd.f32 %v264, %v204
    %vm266 = vcmp.gt.s32.totalorder %v45, 2
    %v267 = vsel %vm266, %v265, %v198
    %v268 = vsel %vm266, 1, 0
    %v269 = vperm.slane %v268, 0
    %vm270 = vcmp.eq.s32.totalorder %v269, 1
    %v271 = vsel %vm270, %v250, %v202
    %v272 = vsel %vm270, %v251, %v203
    %v273 = vsel %vm266, %v263, %v204
    %s274 = scalar_lea.vmem %s1, 48
    %v275 = vld [vmem:[%s274] sm:$0xff]
    %v276 = vld [vmem:[%s274 + $0x8] sm:$0xff]
    %v277 = vadd.f32 %v275, %v55
    %v278 = vadd.f32 %v276, %v60
    %v279 = vsel %vm64, %v277, -inf
    %v280 = vsel %vm64, %v278, -inf
    %v281 = vmax.f32 %v279, %v280
    %v282 = vrot.slane %v281, 4
    %v283 = vmax.f32 %v281, %v282
    %v284 = vrot.slane %v283, 2
    %v285 = vmax.f32 %v283, %v284
    %v286 = vrot.slane %v285, 1
    %v287 = vmax.f32 %v285, %v286
    %288 = vmatpush.msra.mxu0 0.0
    %289 = vmatpush.msra.mxu0 0.0
    %290 = vmatpush.msra.mxu0 0.0
    %291 = vmatpush.msra.mxu0 0.0
    %292 = vmatpush.msra.mxu0 0.0
    %293 = vmatpush.msra.mxu0 0.0
    %294 = vmatpush.msra.mxu0 0.0
    %295 = vmatpush.msra.mxu0 0.0
    %296 = vmatpush.msra.mxu0 0.0
    %297 = vmatpush.msra.mxu0 0.0
    %298 = vmatpush.msra.mxu0 0.0
    %299 = vmatpush.msra.mxu0 0.0
    %300 = vmatpush.msra.mxu0 0.0
    %301 = vmatpush.msra.mxu0 0.0
    %302 = vmatpush.msra.mxu0 %v272
    %303 = vmatpush.msra.mxu0 %v271
    %304 = vmatmul.f32.gmra.mxu0 %v76
    %v305 = vpop.f32.mrf.mxu0
    %v306 = vadd.f32 0.0, %v305
    %307 = vmatmul.f32.gmra.mxu0 %v79
    %v308 = vpop.f32.mrf.mxu0
    %v309 = vadd.f32 0.0, %v308
    %310 = vdwg.mxu0
    %v311 = vadd.f32 %v287, %v273
    %v312 = vperm.slane %v311, 0
    %v313 = vsub.f32 %v277, %v312
    %v314 = vsub.f32 %v278, %v312
    %v315 = vmul.f32 %v313, 1.442695
    %v316 = vpow.pop %v315
    %v317 = vmul.f32 %v314, 1.442695
    %v318 = vpow.pop %v317
    %v319 = vmul.f32 %v316, %v306
    %v320 = vmul.f32 %v318, %v309
    %v321 = vsel %vm64, %v319, -inf
    %v322 = vsel %vm64, %v320, -inf
    %v323 = vmax.f32 %v321, %v322
    %v324 = vrot.slane %v323, 4
    %v325 = vmax.f32 %v323, %v324
    %v326 = vrot.slane %v325, 2
    %v327 = vmax.f32 %v325, %v326
    %v328 = vrot.slane %v327, 1
    %v329 = vmax.f32 %v327, %v328
    %v330 = vmax.f32 %v329, 1e-37
    %v331 = vlog2.pop %v330
    %v332 = vmul.f32 %v331, 0.6931472
    %v333 = vadd.f32 %v267, %v287
    %v334 = vadd.f32 %v333, %v273
    %vm335 = vcmp.gt.s32.totalorder %v45, 3
    %v336 = vsel %vm335, %v334, %v267
    %v337 = vsel %vm335, 1, 0
    %v338 = vperm.slane %v337, 0
    %vm339 = vcmp.eq.s32.totalorder %v338, 1
    %v340 = vsel %vm339, %v319, %v271
    %v341 = vsel %vm339, %v320, %v272
    %v342 = vsel %vm335, %v332, %v273
    %s343 = scalar_lea.vmem %s1, 64
    %v344 = vld [vmem:[%s343] sm:$0xff]
    %v345 = vld [vmem:[%s343 + $0x8] sm:$0xff]
    %v346 = vadd.f32 %v344, %v55
    %v347 = vadd.f32 %v345, %v60
    %v348 = vsel %vm64, %v346, -inf
    %v349 = vsel %vm64, %v347, -inf
    %v350 = vmax.f32 %v348, %v349
    %v351 = vrot.slane %v350, 4
    %v352 = vmax.f32 %v350, %v351
    %v353 = vrot.slane %v352, 2
    %v354 = vmax.f32 %v352, %v353
    %v355 = vrot.slane %v354, 1
    %v356 = vmax.f32 %v354, %v355
    %357 = vmatpush.msra.mxu0 0.0
    %358 = vmatpush.msra.mxu0 0.0
    %359 = vmatpush.msra.mxu0 0.0
    %360 = vmatpush.msra.mxu0 0.0
    %361 = vmatpush.msra.mxu0 0.0
    %362 = vmatpush.msra.mxu0 0.0
    %363 = vmatpush.msra.mxu0 0.0
    %364 = vmatpush.msra.mxu0 0.0
    %365 = vmatpush.msra.mxu0 0.0
    %366 = vmatpush.msra.mxu0 0.0
    %367 = vmatpush.msra.mxu0 0.0
    %368 = vmatpush.msra.mxu0 0.0
    %369 = vmatpush.msra.mxu0 0.0
    %370 = vmatpush.msra.mxu0 0.0
    %371 = vmatpush.msra.mxu0 %v341
    %372 = vmatpush.msra.mxu0 %v340
    %373 = vmatmul.f32.gmra.mxu0 %v76
    %v374 = vpop.f32.mrf.mxu0
    %v375 = vadd.f32 0.0, %v374
    %376 = vmatmul.f32.gmra.mxu0 %v79
    %v377 = vpop.f32.mrf.mxu0
    %v378 = vadd.f32 0.0, %v377
    %379 = vdwg.mxu0
    %v380 = vadd.f32 %v356, %v342
    %v381 = vperm.slane %v380, 0
    %v382 = vsub.f32 %v346, %v381
    %v383 = vsub.f32 %v347, %v381
    %v384 = vmul.f32 %v382, 1.442695
    %v385 = vpow.pop %v384
    %v386 = vmul.f32 %v383, 1.442695
    %v387 = vpow.pop %v386
    %v388 = vmul.f32 %v385, %v375
    %v389 = vmul.f32 %v387, %v378
    %v390 = vsel %vm64, %v388, -inf
    %v391 = vsel %vm64, %v389, -inf
    %v392 = vmax.f32 %v390, %v391
    %v393 = vrot.slane %v392, 4
    %v394 = vmax.f32 %v392, %v393
    %v395 = vrot.slane %v394, 2
    %v396 = vmax.f32 %v394, %v395
    %v397 = vrot.slane %v396, 1
    %v398 = vmax.f32 %v396, %v397
    %v399 = vmax.f32 %v398, 1e-37
    %v400 = vlog2.pop %v399
    %v401 = vmul.f32 %v400, 0.6931472
    %v402 = vadd.f32 %v336, %v356
    %v403 = vadd.f32 %v402, %v342
    %vm404 = vcmp.gt.s32.totalorder %v45, 4
    %v405 = vsel %vm404, %v403, %v336
    %v406 = vsel %vm404, 1, 0
    %v407 = vperm.slane %v406, 0
    %vm408 = vcmp.eq.s32.totalorder %v407, 1
    %v409 = vsel %vm408, %v388, %v340
    %v410 = vsel %vm408, %v389, %v341
    %v411 = vsel %vm404, %v401, %v342
    %s412 = scalar_lea.vmem %s1, 80
    %v413 = vld [vmem:[%s412] sm:$0xff]
    %v414 = vld [vmem:[%s412 + $0x8] sm:$0xff]
    %v415 = vadd.f32 %v413, %v55
    %v416 = vadd.f32 %v414, %v60
    %v417 = vsel %vm64, %v415, -inf
    %v418 = vsel %vm64, %v416, -inf
    %v419 = vmax.f32 %v417, %v418
    %v420 = vrot.slane %v419, 4
    %v421 = vmax.f32 %v419, %v420
    %v422 = vrot.slane %v421, 2
    %v423 = vmax.f32 %v421, %v422
    %v424 = vrot.slane %v423, 1
    %v425 = vmax.f32 %v423, %v424
    %426 = vmatpush.msra.mxu0 0.0
    %427 = vmatpush.msra.mxu0 0.0
    %428 = vmatpush.msra.mxu0 0.0
    %429 = vmatpush.msra.mxu0 0.0
    %430 = vmatpush.msra.mxu0 0.0
    %431 = vmatpush.msra.mxu0 0.0
    %432 = vmatpush.msra.mxu0 0.0
    %433 = vmatpush.msra.mxu0 0.0
    %434 = vmatpush.msra.mxu0 0.0
    %435 = vmatpush.msra.mxu0 0.0
    %436 = vmatpush.msra.mxu0 0.0
    %437 = vmatpush.msra.mxu0 0.0
    %438 = vmatpush.msra.mxu0 0.0
    %439 = vmatpush.msra.mxu0 0.0
    %440 = vmatpush.msra.mxu0 %v410
    %441 = vmatpush.msra.mxu0 %v409
    %442 = vmatmul.f32.gmra.mxu0 %v76
    %v443 = vpop.f32.mrf.mxu0
    %v444 = vadd.f32 0.0, %v443
    %445 = vmatmul.f32.gmra.mxu0 %v79
    %v446 = vpop.f32.mrf.mxu0
    %v447 = vadd.f32 0.0, %v446
    %448 = vdwg.mxu0
    %v449 = vadd.f32 %v425, %v411
    %v450 = vperm.slane %v449, 0
    %v451 = vsub.f32 %v415, %v450
    %v452 = vsub.f32 %v416, %v450
    %v453 = vmul.f32 %v451, 1.442695
    %v454 = vpow.pop %v453
    %v455 = vmul.f32 %v452, 1.442695
    %v456 = vpow.pop %v455
    %v457 = vmul.f32 %v454, %v444
    %v458 = vmul.f32 %v456, %v447
    %v459 = vsel %vm64, %v457, -inf
    %v460 = vsel %vm64, %v458, -inf
    %v461 = vmax.f32 %v459, %v460
    %v462 = vrot.slane %v461, 4
    %v463 = vmax.f32 %v461, %v462
    %v464 = vrot.slane %v463, 2
    %v465 = vmax.f32 %v463, %v464
    %v466 = vrot.slane %v465, 1
    %v467 = vmax.f32 %v465, %v466
    %v468 = vmax.f32 %v467, 1e-37
    %v469 = vlog2.pop %v468
    %v470 = vmul.f32 %v469, 0.6931472
    %v471 = vadd.f32 %v405, %v425
    %v472 = vadd.f32 %v471, %v411
    %vm473 = vcmp.gt.s32.totalorder %v45, 5
    %v474 = vsel %vm473, %v472, %v405
    %v475 = vsel %vm473, 1, 0
    %v476 = vperm.slane %v475, 0
    %vm477 = vcmp.eq.s32.totalorder %v476, 1
    %v478 = vsel %vm477, %v457, %v409
    %v479 = vsel %vm477, %v458, %v410
    %v480 = vsel %vm473, %v470, %v411
    %s481 = scalar_lea.vmem %s1, 96
    %v482 = vld [vmem:[%s481] sm:$0xff]
    %v483 = vld [vmem:[%s481 + $0x8] sm:$0xff]
    %v484 = vadd.f32 %v482, %v55
    %v485 = vadd.f32 %v483, %v60
    %v486 = vsel %vm64, %v484, -inf
    %v487 = vsel %vm64, %v485, -inf
    %v488 = vmax.f32 %v486, %v487
    %v489 = vrot.slane %v488, 4
    %v490 = vmax.f32 %v488, %v489
    %v491 = vrot.slane %v490, 2
    %v492 = vmax.f32 %v490, %v491
    %v493 = vrot.slane %v492, 1
    %v494 = vmax.f32 %v492, %v493
    %495 = vmatpush.msra.mxu0 0.0
    %496 = vmatpush.msra.mxu0 0.0
    %497 = vmatpush.msra.mxu0 0.0
    %498 = vmatpush.msra.mxu0 0.0
    %499 = vmatpush.msra.mxu0 0.0
    %500 = vmatpush.msra.mxu0 0.0
    %501 = vmatpush.msra.mxu0 0.0
    %502 = vmatpush.msra.mxu0 0.0
    %503 = vmatpush.msra.mxu0 0.0
    %504 = vmatpush.msra.mxu0 0.0
    %505 = vmatpush.msra.mxu0 0.0
    %506 = vmatpush.msra.mxu0 0.0
    %507 = vmatpush.msra.mxu0 0.0
    %508 = vmatpush.msra.mxu0 0.0
    %509 = vmatpush.msra.mxu0 %v479
    %510 = vmatpush.msra.mxu0 %v478
    %511 = vmatmul.f32.gmra.mxu0 %v76
    %v512 = vpop.f32.mrf.mxu0
    %v513 = vadd.f32 0.0, %v512
    %514 = vmatmul.f32.gmra.mxu0 %v79
    %v515 = vpop.f32.mrf.mxu0
    %v516 = vadd.f32 0.0, %v515
    %517 = vdwg.mxu0
    %v518 = vadd.f32 %v494, %v480
    %v519 = vperm.slane %v518, 0
    %v520 = vsub.f32 %v484, %v519
    %v521 = vsub.f32 %v485, %v519
    %v522 = vmul.f32 %v520, 1.442695
    %v523 = vpow.pop %v522
    %v524 = vmul.f32 %v521, 1.442695
    %v525 = vpow.pop %v524
    %v526 = vmul.f32 %v523, %v513
    %v527 = vmul.f32 %v525, %v516
    %v528 = vsel %vm64, %v526, -inf
    %v529 = vsel %vm64, %v527, -inf
    %v530 = vmax.f32 %v528, %v529
    %v531 = vrot.slane %v530, 4
    %v532 = vmax.f32 %v530, %v531
    %v533 = vrot.slane %v532, 2
    %v534 = vmax.f32 %v532, %v533
    %v535 = vrot.slane %v534, 1
    %v536 = vmax.f32 %v534, %v535
    %v537 = vmax.f32 %v536, 1e-37
    %v538 = vlog2.pop %v537
    %v539 = vmul.f32 %v538, 0.6931472
    %v540 = vadd.f32 %v474, %v494
    %v541 = vadd.f32 %v540, %v480
    %vm542 = vcmp.gt.s32.totalorder %v45, 6
    %v543 = vsel %vm542, %v541, %v474
    %v544 = vsel %vm542, 1, 0
    %v545 = vperm.slane %v544, 0
    %vm546 = vcmp.eq.s32.totalorder %v545, 1
    %v547 = vsel %vm546, %v526, %v478
    %v548 = vsel %vm546, %v527, %v479
    %v549 = vsel %vm542, %v539, %v480
    %s550 = scalar_lea.vmem %s1, 112
    %v551 = vld [vmem:[%s550] sm:$0xff]
    %v552 = vld [vmem:[%s550 + $0x8] sm:$0xff]
    %v553 = vadd.f32 %v551, %v55
    %v554 = vadd.f32 %v552, %v60
    %v555 = vsel %vm64, %v553, -inf
    %v556 = vsel %vm64, %v554, -inf
    %v557 = vmax.f32 %v555, %v556
    %v558 = vrot.slane %v557, 4
    %v559 = vmax.f32 %v557, %v558
    %v560 = vrot.slane %v559, 2
    %v561 = vmax.f32 %v559, %v560
    %v562 = vrot.slane %v561, 1
    %v563 = vmax.f32 %v561, %v562
    %564 = vmatpush.msra.mxu0 0.0
    %565 = vmatpush.msra.mxu0 0.0
    %566 = vmatpush.msra.mxu0 0.0
    %567 = vmatpush.msra.mxu0 0.0
    %568 = vmatpush.msra.mxu0 0.0
    %569 = vmatpush.msra.mxu0 0.0
    %570 = vmatpush.msra.mxu0 0.0
    %571 = vmatpush.msra.mxu0 0.0
    %572 = vmatpush.msra.mxu0 0.0
    %573 = vmatpush.msra.mxu0 0.0
    %574 = vmatpush.msra.mxu0 0.0
    %575 = vmatpush.msra.mxu0 0.0
    %576 = vmatpush.msra.mxu0 0.0
    %577 = vmatpush.msra.mxu0 0.0
    %578 = vmatpush.msra.mxu0 %v548
    %579 = vmatpush.msra.mxu0 %v547
    %580 = vmatmul.f32.gmra.mxu0 %v76
    %v581 = vpop.f32.mrf.mxu0
    %v582 = vadd.f32 0.0, %v581
    %583 = vmatmul.f32.gmra.mxu0 %v79
    %v584 = vpop.f32.mrf.mxu0
    %v585 = vadd.f32 0.0, %v584
    %586 = vdwg.mxu0
    %v587 = vadd.f32 %v563, %v549
    %v588 = vperm.slane %v587, 0
    %v589 = vsub.f32 %v553, %v588
    %v590 = vsub.f32 %v554, %v588
    %v591 = vmul.f32 %v589, 1.442695
    %v592 = vpow.pop %v591
    %v593 = vmul.f32 %v590, 1.442695
    %v594 = vpow.pop %v593
    %v595 = vmul.f32 %v592, %v582
    %v596 = vmul.f32 %v594, %v585
    %v597 = vsel %vm64, %v595, -inf
    %v598 = vsel %vm64, %v596, -inf
    %v599 = vmax.f32 %v597, %v598
    %v600 = vrot.slane %v599, 4
    %v601 = vmax.f32 %v599, %v600
    %v602 = vrot.slane %v601, 2
    %v603 = vmax.f32 %v601, %v602
    %v604 = vrot.slane %v603, 1
    %v605 = vmax.f32 %v603, %v604
    %v606 = vmax.f32 %v605, 1e-37
    %v607 = vlog2.pop %v606
    %v608 = vmul.f32 %v607, 0.6931472
    %v609 = vadd.f32 %v543, %v563
    %v610 = vadd.f32 %v609, %v549
    %vm611 = vcmp.gt.s32.totalorder %v45, 7
    %v612 = vsel %vm611, %v610, %v543
    %v613 = vsel %vm611, 1, 0
    %v614 = vperm.slane %v613, 0
    %vm615 = vcmp.eq.s32.totalorder %v614, 1
    %v616 = vsel %vm615, %v595, %v547
    %v617 = vsel %vm615, %v596, %v548
    %v618 = vsel %vm611, %v608, %v549
    %vm619 = vcmask 57344
    %620 = vst.msk [vmem:[#allocation3] sm:$0x1] %vm619, %v612
    %621 = vst.msk [vmem:[#allocation2] sm:$0xff] %vm64, %v616
    %622 = vst.msk [vmem:[#allocation2 + $0x8] sm:$0xff] %vm64, %v617
    %623 = vst.msk [vmem:[#allocation4] sm:$0x1] %vm619, %v618
    // Predicated region
    $region26: #{tpu_custom_call.1} parent=1 // pred_check
      %p624 = pneg %p21
    $region27: #{tpu_custom_call.1} parent=1 // pred_check_branch
      %626 = sbr.rel (%p624) target = $region29
    $region28: #{tpu_custom_call.1} parent=1 // pred_region
      %v627 = vld [vmem:[%s4] sm:$0xff]
      %v628 = vld [vmem:[%s4 + $0x8] sm:$0xff]
      %630 = vset.pattern.permute.xlu0 0
      %631 = vperm.xlu0 %630, %v627
      %v632 = vpop.permute.xlu0 %631
      %635 = vset.pattern.permute.xlu0 0
      %636 = vperm.xlu0 %635, %v628
      %v637 = vpop.permute.xlu0 %636
      %v639 = vmul.f32 %v616, %v632
      %v640 = vmul.f32 %v617, %v637
      %v641 = vsel %vm64, %v639, 0.0
      %v642 = vsel %vm64, %v640, 0.0
      %v643 = vadd.f32 %v641, %v642
      %v644 = vrot.slane %v643, 4
      %v645 = vadd.f32 %v643, %v644
      %v646 = vrot.slane %v645, 2
      %v647 = vadd.f32 %v645, %v646
      %v648 = vrot.slane %v647, 1
      %v649 = vadd.f32 %v647, %v648
      %v650 = vmax.f32 %v649, 1e-37
      %v651 = vlog2.pop %v650
      %v652 = vmul.f32 %v651, 0.6931472
      %v653 = vadd.f32 %v612, %v652
      %654 = vst.msk [vmem:[#allocation5] sm:$0x1] %vm619, %v653
    $region29: #{tpu_custom_call.1} parent=1 // pred_fallthru
      _
    // Predicated region
    $region30: #{tpu_custom_call.1} parent=1 // pred_check
      _
    $region31: #{tpu_custom_call.1} parent=1 // pred_check_branch
      %656 = sbr.rel (0) target = $region33
    $region32: #{tpu_custom_call.1} parent=1 // pred_region
      %658 = vsyncadd [#allocation6], 0
      %s660 = sshll.u32 [#allocation5], 4
      %s661 = int_to_ptr.vmem [resolvable:$true] %s660
      %s662 = sshll.u32 %s5, 4
      %s663 = int_to_ptr.hbm [resolvable:$true] %s662
      %665 = dma.vmem_to_hbm [thread:$0]  %s661, 16, %s663, [#allocation6]
    $region33: #{tpu_custom_call.1} parent=1 // pred_fallthru
      _
    // Predicated region
    $region34: #{tpu_custom_call.1} parent=1 // pred_check
      _
    $region35: #{tpu_custom_call.1} parent=1 // pred_check_branch
      %667 = sbr.rel (0) target = $region37
    $region36: #{tpu_custom_call.1} parent=1 // pred_region
      %669 = dma.done [#allocation6], 16
    $region37: #{tpu_custom_call.1} parent=1 // pred_fallthru
      _
    %670 = vsyncpa [#allocation6], 1

</llo_original>
